<compile_context>
chip_gen: v7x
topology: tpu7x:2x2x1
jax: 0.10.0
libtpu: 0.0.40
codegen_flags: <defaults>
</compile_context>

<pallas_src>
import math

import jax
import jax.numpy as jnp
from jax.experimental import pallas as pl
from jax.experimental.pallas import tpu as pltpu


def _round_up(x, m):
    return ((x + m - 1) // m) * m


def _pick_tm(M, target):
    # Small / ragged M: use an exact-fit tile (multiple of 8) instead of padding to target.
    if M <= target:
        return _round_up(max(M, 1), 8)
    return max(8, (target // 8) * 8)


_GELU_C = math.sqrt(2.0 / math.pi)


def _gelu_tanh(x):
    # PyTorch nn.GELU(approximate='tanh'), cheapened polynomial:
    # 0.5*x*(1+tanh(c*(x + 0.044715*x^3))) == (0.5*x)*(1+tanh(x*(c + (0.044715*c)*x^2)))
    x2 = x * x
    inner = x * (_GELU_C + (0.044715 * _GELU_C) * x2)
    return (0.5 * x) * (1.0 + jnp.tanh(inner))


# --------------------------------------------------------------------------------------
# Kernels
# --------------------------------------------------------------------------------------
def mlp_resident_kernel(x_ref, wfc_ref, bfc_ref, wproj_ref, bproj_ref, o_ref):
    """Weights fully VMEM-resident: one grid step per M tile, no reduction axis."""
    xv = x_ref[...].astype(wfc_ref.dtype)                         # cast per-tile (bf16)
    pre = jnp.dot(xv, wfc_ref[...], preferred_element_type=jnp.float32)
    pre = pre + bfc_ref[...]                                      # f32 bias
    g = _gelu_tanh(pre)                                           # f32 GELU
    out = jnp.dot(g.astype(wproj_ref.dtype), wproj_ref[...],
                  preferred_element_type=jnp.float32)
    o_ref[...] = (out + bproj_ref[...]).astype(o_ref.dtype)


def mlp_streaming_kernel(x_ref, wfc_ref, bfc_ref, wproj_ref, bproj_ref, o_ref, acc_ref):
    """H (=4C) streamed through VMEM in th-chunks; f32 accumulator over the H axis."""
    h = pl.program_id(1)

    xv = x_ref[...].astype(wfc_ref.dtype)
    pre = jnp.dot(xv, wfc_ref[...], preferred_element_type=jnp.float32)
    pre = pre + bfc_ref[...]
    g = _gelu_tanh(pre)
    part = jnp.dot(g.astype(wproj_ref.dtype), wproj_ref[...],
                   preferred_element_type=jnp.float32)

    # Skip the explicit zero pass: first H step writes, later steps accumulate.
    @pl.when(h == 0)
    def _():
        acc_ref[...] = part

    @pl.when(h > 0)
    def _():
        acc_ref[...] += part

    @pl.when(h == pl.num_programs(1) - 1)
    def _():
        o_ref[...] = (acc_ref[...] + bproj_ref[...]).astype(o_ref.dtype)


# --------------------------------------------------------------------------------------
# Wrapper
# --------------------------------------------------------------------------------------
def mlp_pallas(
    x,
    w_fc,
    b_fc,
    w_proj,
    b_proj,
    *,
    tm=None,                      # None -> 256 (resident) / 512 (streaming), clamped to M
    th=None,                      # None -> H (resident) / largest fitting divisor (streaming)
    compute_dtype=jnp.bfloat16,
    out_dtype=None,               # emit bf16 here if the surrounding network is bf16
    weights_resident=None,        # None = auto-decide from VMEM budget; True/False to force
    even_num_m_tiles=False,       # set True on v7x: the parallel M axis shards across 2 TCs
    vmem_budget_bytes=56 * 1024 * 1024,   # sized against v7x's 64 MiB VMEM
):
    """x: (B, T, C). w_fc: (C, 4C), b_fc: (4C,), w_proj: (4C, C), b_proj: (C,)."""
    B, T, C = x.shape
    Cw, H = w_fc.shape
    assert Cw == C and w_proj.shape == (H, C)
    M = B * T
    out_dtype = out_dtype or x.dtype

    # Weights in MXU dtype. Pre-cast (and store) them in compute_dtype upstream to avoid
    # a full HBM re-cast pass on every invocation; these astypes are no-ops in that case.
    w_fc_c = w_fc if w_fc.dtype == compute_dtype else w_fc.astype(compute_dtype)
    w_proj_c = w_proj if w_proj.dtype == compute_dtype else w_proj.astype(compute_dtype)
    b_fc2 = b_fc.reshape(1, H).astype(jnp.float32)
    b_proj2 = b_proj.reshape(1, C).astype(jnp.float32)

    x_itemsize = jnp.dtype(x.dtype).itemsize
    w_itemsize = jnp.dtype(compute_dtype).itemsize
    out_itemsize = jnp.dtype(out_dtype).itemsize

    def footprint(tm_, th_, streaming):
        fp = 2 * tm_ * C * x_itemsize          # x tile (double-buffered)
        fp += 2 * C * th_ * w_itemsize         # W_fc block
        fp += 2 * th_ * 4                      # b_fc block (f32)
        fp += 2 * th_ * C * w_itemsize         # W_proj block
        fp += 2 * C * 4                        # b_proj
        fp += 2 * tm_ * C * out_itemsize       # out tile
        fp += 2 * tm_ * th_ * 4                # f32 pre-activation + GELU intermediates
        if streaming:
            fp += tm_ * C * 4                  # f32 accumulator scratch
        return fp

    # ---- Decide weight residency (th = H, single reduction step) vs H-streaming.
    tm_res = _pick_tm(M, tm if tm is not None else 256)
    if weights_resident is None:
        weights_resident = footprint(tm_res, H, streaming=False) <= vmem_budget_bytes

    if weights_resident:
        tm_eff = tm_res
        th_eff = H
    else:
        # Streaming: bigger row tile to keep arithmetic intensity above the HBM ridge.
        tm_eff = _pick_tm(M, tm if tm is not None else 512)
        assert H % 128 == 0, "hidden dim (4*n_embd) must be a multiple of 128 for streaming"
        if th is None:
            th_eff = 128
            for cand in range(H, 127, -128):
                if H % cand == 0 and footprint(tm_eff, cand, streaming=True) <= vmem_budget_bytes:
                    th_eff = cand
                    break
        else:
            th_eff = th
        assert H % th_eff == 0 and (th_eff % 128 == 0 or th_eff == H)

    M_pad = _round_up(M, tm_eff)
    num_m_tiles = M_pad // tm_eff
    if even_num_m_tiles and num_m_tiles > 1 and num_m_tiles % 2 == 1:
        num_m_tiles += 1
        M_pad = num_m_tiles * tm_eff

    x2 = x.reshape(M, C)
    if M_pad != M:
        x2 = jnp.pad(x2, ((0, M_pad - M), (0, 0)))

    # ---- Cost estimate reflecting actual tiling.
    weight_bytes = (C * H + H * C) * w_itemsize
    if not weights_resident:
        weight_bytes *= num_m_tiles            # weights re-streamed once per M tile
    cost = pl.CostEstimate(
        flops=2 * M_pad * C * H * 2,           # two matmuls
        transcendentals=M_pad * H,             # tanh in GELU
        bytes_accessed=(M_pad * C * x_itemsize + weight_bytes + H * 4 + C * 4
                        + M_pad * C * out_itemsize),
    )
    compiler_params = pltpu.CompilerParams(
        dimension_semantics=("parallel",) if weights_resident else ("parallel", "arbitrary"),
        vmem_limit_bytes=vmem_budget_bytes,
    )

    if weights_resident:
        out2 = pl.pallas_call(
            mlp_resident_kernel,
            out_shape=jax.ShapeDtypeStruct((M_pad, C), out_dtype),
            grid_spec=pltpu.PrefetchScalarGridSpec(
                num_scalar_prefetch=0,
                grid=(num_m_tiles,),
                in_specs=[
                    pl.BlockSpec((tm_eff, C), lambda i: (i, 0)),   # x rows tile
                    pl.BlockSpec((C, H), lambda i: (0, 0)),        # W_fc (resident)
                    pl.BlockSpec((1, H), lambda i: (0, 0)),        # b_fc
                    pl.BlockSpec((H, C), lambda i: (0, 0)),        # W_proj (resident)
                    pl.BlockSpec((1, C), lambda i: (0, 0)),        # b_proj
                ],
                out_specs=pl.BlockSpec((tm_eff, C), lambda i: (i, 0)),
            ),
            compiler_params=compiler_params,
            cost_estimate=cost,
        )(x2, w_fc_c, b_fc2, w_proj_c, b_proj2)
    else:
        out2 = pl.pallas_call(
            mlp_streaming_kernel,
            out_shape=jax.ShapeDtypeStruct((M_pad, C), out_dtype),
            grid_spec=pltpu.PrefetchScalarGridSpec(
                num_scalar_prefetch=0,
                grid=(num_m_tiles, H // th_eff),                   # reduction axis last
                in_specs=[
                    pl.BlockSpec((tm_eff, C), lambda i, h: (i, 0)),
                    pl.BlockSpec((C, th_eff), lambda i, h: (0, h)),
                    pl.BlockSpec((1, th_eff), lambda i, h: (0, h)),
                    pl.BlockSpec((th_eff, C), lambda i, h: (h, 0)),
                    pl.BlockSpec((1, C), lambda i, h: (0, 0)),
                ],
                out_specs=pl.BlockSpec((tm_eff, C), lambda i, h: (i, 0)),
                scratch_shapes=[pltpu.VMEM((tm_eff, C), jnp.float32)],
            ),
            compiler_params=compiler_params,
            cost_estimate=cost,
        )(x2, w_fc_c, b_fc2, w_proj_c, b_proj2)

    if M_pad != M:
        out2 = out2[:M]
    return out2.reshape(B, T, C)


def mlp_reference(x, w_fc, b_fc, w_proj, b_proj, compute_dtype=jnp.bfloat16, out_dtype=None):
    # Mirrors kernel numerics: bf16 matmul operands, f32 accumulation, f32 GELU.
    out_dtype = out_dtype or x.dtype
    xf = x.astype(compute_dtype).astype(jnp.float32)
    wfc = w_fc.astype(compute_dtype).astype(jnp.float32)
    wproj = w_proj.astype(compute_dtype).astype(jnp.float32)
    h = jnp.einsum("btc,ch->bth", xf, wfc, precision=jax.lax.Precision.HIGHEST)
    h = h + b_fc.astype(jnp.float32)
    g = _gelu_tanh(h).astype(compute_dtype).astype(jnp.float32)
    o = jnp.einsum("bth,hc->btc", g, wproj, precision=jax.lax.Precision.HIGHEST)
    o = o + b_proj.astype(jnp.float32)
    return o.astype(out_dtype)


if __name__ == "__main__":
    key = jax.random.PRNGKey(0)

    def make_params(kp, C, H):
        k1, k2, k3, k4 = jax.random.split(kp, 4)
        w_fc = jax.random.normal(k1, (C, H), dtype=jnp.float32) * (1.0 / math.sqrt(C))
        b_fc = jax.random.normal(k2, (H,), dtype=jnp.float32) * 0.01
        w_proj = jax.random.normal(k3, (H, C), dtype=jnp.float32) * (1.0 / math.sqrt(H))
        b_proj = jax.random.normal(k4, (C,), dtype=jnp.float32) * 0.01
        return w_fc, b_fc, w_proj, b_proj

    # ---- Test 1: tiny GPT-2-style config (n_embd=32 -> hidden=128), resident path.
    B, T, C = 2, 8, 32
    H = 4 * C
    kx, kp, key = jax.random.split(key, 3)
    x = jax.random.normal(kx, (B, T, C), dtype=jnp.float32)
    w_fc, b_fc, w_proj, b_proj = make_params(kp, C, H)
    # Pre-cast weights to bf16 once (in real use, store the params in bf16 upstream).
    out = mlp_pallas(x, w_fc.astype(jnp.bfloat16), b_fc,
                     w_proj.astype(jnp.bfloat16), b_proj)
    out = jax.block_until_ready(out)
    ref = mlp_reference(x, w_fc, b_fc, w_proj, b_proj)
    assert out.shape == (B, T, C)
    assert jnp.allclose(out, ref, atol=2e-2, rtol=2e-2), "resident-path mismatch (tiny)"

    # ---- Test 2: (8,128)-tiled blocks, multiple M tiles + ragged-M padding, resident path.
    B2, T2, C2 = 3, 96, 128
    H2 = 4 * C2
    kx2, kp2, key = jax.random.split(key, 3)
    xb = jax.random.normal(kx2, (B2, T2, C2), dtype=jnp.float32)
    w_fc2, b_fc2, w_proj2, b_proj2 = make_params(kp2, C2, H2)
    out_b = mlp_pallas(xb, w_fc2.astype(jnp.bfloat16), b_fc2,
                       w_proj2.astype(jnp.bfloat16), b_proj2, tm=128)
    out_b = jax.block_until_ready(out_b)
    ref_b = mlp_reference(xb, w_fc2, b_fc2, w_proj2, b_proj2)
    assert out_b.shape == (B2, T2, C2)
    assert jnp.allclose(out_b, ref_b, atol=2e-2, rtol=2e-2), "resident-path mismatch (tiled)"

    # ---- Test 3: forced H-streaming fallback path (multi-step f32 accumulation).
    out_c = mlp_pallas(xb, w_fc2.astype(jnp.bfloat16), b_fc2,
                       w_proj2.astype(jnp.bfloat16), b_proj2,
                       tm=128, th=128, weights_resident=False)
    out_c = jax.block_until_ready(out_c)
    assert jnp.allclose(out_c, ref_b, atol=2e-2, rtol=2e-2), "streaming-path mismatch"

    print("KERNEL_OK")
</pallas_src>

<mosaic_0001>
module attributes {stable_mosaic.version = 11 : i64} {
  func.func @mlp_resident_kernel(%arg0: i32, %arg1: memref<16x32xf32, #tpu.memory_space<vmem>>, %arg2: memref<32x128xbf16, #tpu.memory_space<vmem>>, %arg3: memref<1x128xf32, #tpu.memory_space<vmem>>, %arg4: memref<128x32xbf16, #tpu.memory_space<vmem>>, %arg5: memref<1x32xf32, #tpu.memory_space<vmem>>, %arg6: memref<16x32xf32, #tpu.memory_space<vmem>>) attributes {dimension_semantics = [#tpu.dimension_semantics<parallel>], iteration_bounds = array<i64: 1>, scalar_prefetch = 0 : i64, scratch_operands = 0 : i64, tpu.core_type = #tpu.core_type<tc>, window_params = [{transform_indices = @transform_0, window_bounds = array<i64: 16, 32>}, {pipeline_mode = #tpu.pipeline_mode<synchronous>, transform_indices = @transform_1, window_bounds = array<i64: 32, 128>}, {pipeline_mode = #tpu.pipeline_mode<synchronous>, transform_indices = @transform_2, window_bounds = array<i64: 1, 128>}, {pipeline_mode = #tpu.pipeline_mode<synchronous>, transform_indices = @transform_3, window_bounds = array<i64: 128, 32>}, {pipeline_mode = #tpu.pipeline_mode<synchronous>, transform_indices = @transform_4, window_bounds = array<i64: 1, 32>}, {transform_indices = @transform_5, window_bounds = array<i64: 16, 32>}]} {
    %c0 = arith.constant 0 : index
    %c0_0 = arith.constant 0 : index
    %0 = vector.load %arg1[%c0, %c0_0] : memref<16x32xf32, #tpu.memory_space<vmem>>, vector<16x32xf32>
    %1 = arith.truncf %0 : vector<16x32xf32> to vector<16x32xbf16>
    %c0_1 = arith.constant 0 : index
    %c0_2 = arith.constant 0 : index
    %2 = vector.load %arg2[%c0_1, %c0_2] : memref<32x128xbf16, #tpu.memory_space<vmem>>, vector<32x128xbf16>
    %cst = arith.constant dense<0.000000e+00> : vector<16x128xf32>
    %3 = tpu.matmul %1, %2, %cst {dimension_numbers = #tpu.dot_dimension_numbers<[1], [0], [0], [1], [0, 0, 1, 1], [], []>} : vector<16x32xbf16>, vector<32x128xbf16>, vector<16x128xf32> -> vector<16x128xf32>
    %c0_3 = arith.constant 0 : index
    %c0_4 = arith.constant 0 : index
    %4 = vector.load %arg3[%c0_3, %c0_4] : memref<1x128xf32, #tpu.memory_space<vmem>>, vector<1x128xf32>
    %5 = vector.broadcast %4 : vector<1x128xf32> to vector<16x128xf32>
    %6 = arith.addf %3, %5 : vector<16x128xf32>
    %7 = arith.mulf %6, %6 : vector<16x128xf32>
    %cst_5 = arith.constant 0.0356774069 : f32
    %8 = vector.broadcast %cst_5 : f32 to vector<16x128xf32>
    %9 = arith.mulf %8, %7 : vector<16x128xf32>
    %cst_6 = arith.constant 0.797884583 : f32
    %10 = vector.broadcast %cst_6 : f32 to vector<16x128xf32>
    %11 = arith.addf %10, %9 : vector<16x128xf32>
    %12 = arith.mulf %6, %11 : vector<16x128xf32>
    %cst_7 = arith.constant 5.000000e-01 : f32
    %13 = vector.broadcast %cst_7 : f32 to vector<16x128xf32>
    %14 = arith.mulf %13, %6 : vector<16x128xf32>
    %15 = math.tanh %12 : vector<16x128xf32>
    %cst_8 = arith.constant 1.000000e+00 : f32
    %16 = vector.broadcast %cst_8 : f32 to vector<16x128xf32>
    %17 = arith.addf %16, %15 : vector<16x128xf32>
    %18 = arith.mulf %14, %17 : vector<16x128xf32>
    %19 = arith.truncf %18 : vector<16x128xf32> to vector<16x128xbf16>
    %c0_9 = arith.constant 0 : index
    %c0_10 = arith.constant 0 : index
    %20 = vector.load %arg4[%c0_9, %c0_10] : memref<128x32xbf16, #tpu.memory_space<vmem>>, vector<128x32xbf16>
    %cst_11 = arith.constant dense<0.000000e+00> : vector<16x32xf32>
    %21 = tpu.matmul %19, %20, %cst_11 {dimension_numbers = #tpu.dot_dimension_numbers<[1], [0], [0], [1], [0, 0, 1, 1], [], []>} : vector<16x128xbf16>, vector<128x32xbf16>, vector<16x32xf32> -> vector<16x32xf32>
    %c0_12 = arith.constant 0 : index
    %c0_13 = arith.constant 0 : index
    %22 = vector.load %arg5[%c0_12, %c0_13] : memref<1x32xf32, #tpu.memory_space<vmem>>, vector<1x32xf32>
    %23 = vector.broadcast %22 : vector<1x32xf32> to vector<16x32xf32>
    %24 = arith.addf %21, %23 : vector<16x32xf32>
    %c0_14 = arith.constant 0 : index
    %c0_15 = arith.constant 0 : index
    %25 = vector.load %arg6[%c0_14, %c0_15] : memref<16x32xf32, #tpu.memory_space<vmem>>, vector<16x32xf32>
    tpu.vector_store %arg6[%c0_14, %c0_15], %24 {strides = array<i32>} : memref<16x32xf32, #tpu.memory_space<vmem>>, vector<16x32xf32>,
    return
  }
  func.func @transform_0(%arg0: i32) -> (i32, i32) {
    %c0_i32 = arith.constant 0 : i32
    %c0_i32_0 = arith.constant 0 : i32
    return %arg0, %c0_i32 : i32, i32
  }
  func.func @transform_1(%arg0: i32) -> (i32, i32) {
    %c0_i32 = arith.constant 0 : i32
    %c0_i32_0 = arith.constant 0 : i32
    %c0_i32_1 = arith.constant 0 : i32
    return %c0_i32, %c0_i32_0 : i32, i32
  }
  func.func @transform_2(%arg0: i32) -> (i32, i32) {
    %c0_i32 = arith.constant 0 : i32
    %c0_i32_0 = arith.constant 0 : i32
    %c0_i32_1 = arith.constant 0 : i32
    return %c0_i32, %c0_i32_0 : i32, i32
  }
  func.func @transform_3(%arg0: i32) -> (i32, i32) {
    %c0_i32 = arith.constant 0 : i32
    %c0_i32_0 = arith.constant 0 : i32
    %c0_i32_1 = arith.constant 0 : i32
    return %c0_i32, %c0_i32_0 : i32, i32
  }
  func.func @transform_4(%arg0: i32) -> (i32, i32) {
    %c0_i32 = arith.constant 0 : i32
    %c0_i32_0 = arith.constant 0 : i32
    %c0_i32_1 = arith.constant 0 : i32
    return %c0_i32, %c0_i32_0 : i32, i32
  }
  func.func @transform_5(%arg0: i32) -> (i32, i32) {
    %c0_i32 = arith.constant 0 : i32
    %c0_i32_0 = arith.constant 0 : i32
    return %arg0, %c0_i32 : i32, i32
  }
}

</mosaic_0001>

<llo_original>
// kernel: tpu_custom_call.1
$region0: #{tpu_custom_call.1}
  #allocation0 [shape = 'u32[]', space=smem, size = 0x4, offset = 0x4, fixed_abs, tag = 'smem constant byte address 0x4 - core index']
  #allocation1 [shape = 'u32[144,128]{1,0:T(1,128)}', space=vmem, size = 0x12000, scoped, tag = 'internal scratch']
  %s0 = inlined_call_operand.vmem [shape: f32[16,32], index: 0, kind: input, shape index: {}]
  %s1 = inlined_call_operand.vmem [shape: bf16[32,128], index: 1, kind: input, shape index: {}]
  %s2 = inlined_call_operand.vmem [shape: f32[1,128], index: 2, kind: input, shape index: {}]
  %s3 = inlined_call_operand.vmem [shape: bf16[128,32], index: 3, kind: input, shape index: {}]
  %s4 = inlined_call_operand.vmem [shape: f32[1,32], index: 4, kind: input, shape index: {}]
  %s5 = inlined_call_operand.hbm [shape: f32[16,32], index: 5, kind: output, shape index: {}]
  %s6 = sld [smem:[#allocation0]]
  $region30: #{tpu_custom_call.1} parent=0
    _
  %s8 = ssub.s32 1, %s6
  %s9 = scalar_select 0, %s8, %s6
  $region1: #{tpu_custom_call.1} parent=0
    #allocation2 [shape = 'u8[8192]{0}', space=vmem, size = 0x2000, scoped, tag = 'output window, operand 0, single buffered']
    #allocation3 [shape = 's32[1]{0}', space=sflag, size = 0x4, scoped, tag = 'scoped memory for tpu_custom_call.1']
    %10 = vsyncpa [#allocation3], 0
    // Predicated region
    $region2: #{tpu_custom_call.1} parent=1 // pred_check
      _
    $region3: #{tpu_custom_call.1} parent=1 // pred_check_branch
      %12 = sbr.rel (0) target = $region5
    $region4: #{tpu_custom_call.1} parent=1 // pred_region
      _
    $region5: #{tpu_custom_call.1} parent=1 // pred_fallthru
      _
    // Predicated region
    $region6: #{tpu_custom_call.1} parent=1 // pred_check
      _
    $region7: #{tpu_custom_call.1} parent=1 // pred_check_branch
      %14 = sbr.rel (0) target = $region9
    $region8: #{tpu_custom_call.1} parent=1 // pred_region
      _
    $region9: #{tpu_custom_call.1} parent=1 // pred_fallthru
      _
    // Predicated region
    $region10: #{tpu_custom_call.1} parent=1 // pred_check
      _
    $region11: #{tpu_custom_call.1} parent=1 // pred_check_branch
      %16 = sbr.rel (0) target = $region13
    $region12: #{tpu_custom_call.1} parent=1 // pred_region
      _
    $region13: #{tpu_custom_call.1} parent=1 // pred_fallthru
      _
    // Predicated region
    $region14: #{tpu_custom_call.1} parent=1 // pred_check
      _
    $region15: #{tpu_custom_call.1} parent=1 // pred_check_branch
      %18 = sbr.rel (0) target = $region17
    $region16: #{tpu_custom_call.1} parent=1 // pred_region
      _
    $region17: #{tpu_custom_call.1} parent=1 // pred_fallthru
      _
    // Predicated region
    $region18: #{tpu_custom_call.1} parent=1 // pred_check
      _
    $region19: #{tpu_custom_call.1} parent=1 // pred_check_branch
      %20 = sbr.rel (0) target = $region21
    $region20: #{tpu_custom_call.1} parent=1 // pred_region
      _
    $region21: #{tpu_custom_call.1} parent=1 // pred_fallthru
      _
    %v22 = vld [vmem:[%s0] sm:$0xff]
    %v23 = vld [vmem:[%s0 + $0x8] sm:$0xff]
    %v24 = vpack.c.bf16 %v23, %v22
    %v25 = vld [vmem:[%s1] sm:$0xf]
    %v26 = vld [vmem:[%s1 + $0x4] sm:$0xf]
    %v27 = vld [vmem:[%s1 + $0x8] sm:$0xf]
    %v28 = vld [vmem:[%s1 + $0xc] sm:$0xf]
    %v29 = vld [vmem:[%s2] sm:$0x1]
    %v31 = vlaneseq
    %v32 = vshrl.u32 %v31, 7
    %v33 = vsub.s32 0, %v32
    %v34 = vrot.slane %v29, %v33
    %v40 = vunpack.c.l.b16 %v25
    %v41 = vunpack.c.l.b16 %v26
    %v42 = vunpack.c.l.b16 %v27
    %v43 = vunpack.c.l.b16 %v28
    %v44 = vpack.c.b16 %v41, %v40
    %v45 = vpack.c.b16 %v43, %v42
    %vm48 = vcmask 261120
    %v50 = vsel %vm48, %v24, 0
    %52 = vmatprep.subr.bf16.mxu0 0
    %53 = vmatpush1.bf16.msra.mxu0 %v44
    %54 = vmatprep.subr.bf16.mxu0 0
    %55 = vmatpush1.bf16.msra.mxu0 %v45
    %56 = vmatprep.subr.bf16.mxu0 0
    %57 = vmatpush1.bf16.msra.mxu0 0
    %58 = vmatprep.subr.bf16.mxu0 0
    %59 = vmatpush1.bf16.msra.mxu0 0
    %60 = vmatprep.subr.bf16.mxu0 0
    %61 = vmatpush1.bf16.msra.mxu0 0
    %62 = vmatprep.subr.bf16.mxu0 0
    %63 = vmatpush1.bf16.msra.mxu0 0
    %64 = vmatprep.subr.bf16.mxu0 0
    %65 = vmatpush1.bf16.msra.mxu0 0
    %66 = vmatprep.subr.bf16.mxu0 0
    %67 = vmatpush1.bf16.msra.mxu0 0
    %68 = vmatprep.subr.bf16.mxu0 0
    %69 = vmatpush1.bf16.msra.mxu0 0
    %70 = vmatprep.subr.bf16.mxu0 0
    %71 = vmatpush1.bf16.msra.mxu0 0
    %72 = vmatprep.subr.bf16.mxu0 0
    %73 = vmatpush1.bf16.msra.mxu0 0
    %74 = vmatprep.subr.bf16.mxu0 0
    %75 = vmatpush1.bf16.msra.mxu0 0
    %76 = vmatprep.subr.bf16.mxu0 0
    %77 = vmatpush1.bf16.msra.mxu0 0
    %78 = vmatprep.subr.bf16.mxu0 0
    %79 = vmatpush1.bf16.msra.mxu0 0
    %80 = vmatprep.subr.bf16.mxu0 0
    %81 = vmatpush1.bf16.msra.mxu0 0
    %82 = vmatprep.subr.bf16.mxu0 0
    %83 = vmatpush1.bf16.msra.mxu0 0
    %84 = vmatprep.mubr.bf16.mxu0 0
    %85 = vmatmul.mubr.bf16.gmra.mrb[0].mxu0 %v50
    %v86 = vpop.f32.mrb[0].mxu0
    %v87 = vadd.f32 %v34, %v86
    %v88 = vpop.f32.mrb[0].mxu0
    %v89 = vpop.f32.mrb[0].mxu0
    %v90 = vadd.f32 %v34, %v89
    %v91 = vpop.f32.mrb[0].mxu0
    %92 = vdwg.mxu0
    %v93 = vmul.f32 %v87, %v87
    %v94 = vmul.f32 %v90, %v90
    %v95 = vmul.f32 %v93, 0.035677407
    %v96 = vmul.f32 %v94, 0.035677407
    %v97 = vadd.f32 %v95, 0.7978846
    %v98 = vadd.f32 %v96, 0.7978846
    %v99 = vmul.f32 %v87, %v97
    %v100 = vmul.f32 %v90, %v98
    %v101 = vmul.f32 %v87, 0.5
    %v102 = vmul.f32 %v90, 0.5
    %v103 = vtanh.pop %v99
    %v104 = vtanh.pop %v100
    %v105 = vadd.f32 %v103, 1.0
    %v106 = vadd.f32 %v104, 1.0
    %v107 = vmul.f32 %v101, %v105
    %v108 = vmul.f32 %v102, %v106
    %v109 = vpack.c.bf16 %v108, %v107
    %v110 = vld [vmem:[%s3] sm:$0xf]
    %v111 = vld [vmem:[%s3 + $0x4] sm:$0xf]
    %v112 = vld [vmem:[%s3 + $0x8] sm:$0xf]
    %v113 = vld [vmem:[%s3 + $0xc] sm:$0xf]
    %v114 = vld [vmem:[%s3 + $0x10] sm:$0xf]
    %v115 = vld [vmem:[%s3 + $0x14] sm:$0xf]
    %v116 = vld [vmem:[%s3 + $0x18] sm:$0xf]
    %v117 = vld [vmem:[%s3 + $0x1c] sm:$0xf]
    %v118 = vld [vmem:[%s3 + $0x20] sm:$0xf]
    %v119 = vld [vmem:[%s3 + $0x24] sm:$0xf]
    %v120 = vld [vmem:[%s3 + $0x28] sm:$0xf]
    %v121 = vld [vmem:[%s3 + $0x2c] sm:$0xf]
    %v122 = vld [vmem:[%s3 + $0x30] sm:$0xf]
    %v123 = vld [vmem:[%s3 + $0x34] sm:$0xf]
    %v124 = vld [vmem:[%s3 + $0x38] sm:$0xf]
    %v125 = vld [vmem:[%s3 + $0x3c] sm:$0xf]
    %v126 = vld [vmem:[%s4] sm:$0x1]
    %v128 = vlaneseq
    %v129 = vshrl.u32 %v128, 7
    %v130 = vsub.s32 0, %v129
    %v131 = vrot.slane %v126, %v130
    %v149 = vunpack.c.l.b16 %v110
    %v150 = vunpack.c.l.b16 %v111
    %v151 = vunpack.c.l.b16 %v112
    %v152 = vunpack.c.l.b16 %v113
    %v153 = vunpack.c.l.b16 %v114
    %v154 = vunpack.c.l.b16 %v115
    %v155 = vunpack.c.l.b16 %v116
    %v156 = vunpack.c.l.b16 %v117
    %v157 = vunpack.c.l.b16 %v118
    %v158 = vunpack.c.l.b16 %v119
    %v159 = vunpack.c.l.b16 %v120
    %v160 = vunpack.c.l.b16 %v121
    %v161 = vunpack.c.l.b16 %v122
    %v162 = vunpack.c.l.b16 %v123
    %v163 = vunpack.c.l.b16 %v124
    %v164 = vunpack.c.l.b16 %v125
    %v165 = vpack.c.b16 %v150, %v149
    %v166 = vpack.c.b16 %v152, %v151
    %v167 = vpack.c.b16 %v154, %v153
    %v168 = vpack.c.b16 %v156, %v155
    %v169 = vpack.c.b16 %v158, %v157
    %v170 = vpack.c.b16 %v160, %v159
    %v171 = vpack.c.b16 %v162, %v161
    %v172 = vpack.c.b16 %v164, %v163
    %181 = vmatprep.subr.bf16.mxu0 0
    %182 = vmatpush1.bf16.msra.mxu0 %v165
    %183 = vmatprep.subr.bf16.mxu0 0
    %184 = vmatpush1.bf16.msra.mxu0 %v166
    %185 = vmatprep.subr.bf16.mxu0 0
    %186 = vmatpush1.bf16.msra.mxu0 %v167
    %187 = vmatprep.subr.bf16.mxu0 0
    %188 = vmatpush1.bf16.msra.mxu0 %v168
    %189 = vmatprep.subr.bf16.mxu0 0
    %190 = vmatpush1.bf16.msra.mxu0 %v169
    %191 = vmatprep.subr.bf16.mxu0 0
    %192 = vmatpush1.bf16.msra.mxu0 %v170
    %193 = vmatprep.subr.bf16.mxu0 0
    %194 = vmatpush1.bf16.msra.mxu0 %v171
    %195 = vmatprep.subr.bf16.mxu0 0
    %196 = vmatpush1.bf16.msra.mxu0 %v172
    %197 = vmatprep.subr.bf16.mxu0 0
    %198 = vmatpush1.bf16.msra.mxu0 0
    %199 = vmatprep.subr.bf16.mxu0 0
    %200 = vmatpush1.bf16.msra.mxu0 0
    %201 = vmatprep.subr.bf16.mxu0 0
    %202 = vmatpush1.bf16.msra.mxu0 0
    %203 = vmatprep.subr.bf16.mxu0 0
    %204 = vmatpush1.bf16.msra.mxu0 0
    %205 = vmatprep.subr.bf16.mxu0 0
    %206 = vmatpush1.bf16.msra.mxu0 0
    %207 = vmatprep.subr.bf16.mxu0 0
    %208 = vmatpush1.bf16.msra.mxu0 0
    %209 = vmatprep.subr.bf16.mxu0 0
    %210 = vmatpush1.bf16.msra.mxu0 0
    %211 = vmatprep.subr.bf16.mxu0 0
    %212 = vmatpush1.bf16.msra.mxu0 0
    %213 = vmatprep.mubr.bf16.mxu0 0
    %214 = vmatmul.mubr.bf16.gmra.mrb[0].mxu0 %v109
    %v215 = vpop.f32.mrb[0].mxu0
    %v216 = vadd.f32 %v131, %v215
    %v217 = vpop.f32.mrb[0].mxu0
    %v218 = vpop.f32.mrb[0].mxu0
    %v219 = vadd.f32 %v131, %v218
    %v220 = vpop.f32.mrb[0].mxu0
    %221 = vdwg.mxu0
    %222 = vst.msk [vmem:[#allocation2] sm:$0xff] %vm48, %v216
    %223 = vst.msk [vmem:[#allocation2 + $0x8] sm:$0xff] %vm48, %v219
    // Predicated region
    $region22: #{tpu_custom_call.1} parent=1 // pred_check
      _
    $region23: #{tpu_custom_call.1} parent=1 // pred_check_branch
      %225 = sbr.rel (0) target = $region25
    $region24: #{tpu_custom_call.1} parent=1 // pred_region
      %s227 = ssub.s32 256, 256
      %228 = vsyncadd [#allocation3], %s227
      %s229 = sshll.u32 [#allocation2], 4
      %s230 = int_to_ptr.vmem [resolvable:$true] %s229
      %235 = dma.vmem_to_hbm [thread:$0]  %s230, 256, %s5, [#allocation3], 128, 128, 8
    $region25: #{tpu_custom_call.1} parent=1 // pred_fallthru
      _
    // Predicated region
    $region26: #{tpu_custom_call.1} parent=1 // pred_check
      _
    $region27: #{tpu_custom_call.1} parent=1 // pred_check_branch
      %237 = sbr.rel (0) target = $region29
    $region28: #{tpu_custom_call.1} parent=1 // pred_region
      %238 = dma.done [#allocation3], 256
    $region29: #{tpu_custom_call.1} parent=1 // pred_fallthru
      _
    %239 = vsyncpa [#allocation3], 1

</llo_original>
